<compile_context>
chip_gen: v5e
topology: v5e:2x2
jax: 0.10.0
libtpu: 0.0.40
codegen_flags: <defaults>
</compile_context>

<pallas_src>
import functools

import jax
import jax.numpy as jnp
from jax import lax
from jax.experimental import pallas as pl
from jax.experimental.pallas import tpu as pltpu


def _round_up(v, m):
    return ((v + m - 1) // m) * m


def _linear_stack_kernel(x_ref, w_ref, b_ref, o_ref, *, n_layer):
    """x_ref: (TB, D) f32; w_ref: (L, D, D) bf16 (in, out); b_ref: (L, 1, D) f32."""
    # Carry the activation in bf16 between layers (halves vreg/VMEM footprint,
    # one cast on entry instead of one per layer); every matmul still
    # accumulates in f32 on the MXU and the bias add is done in f32.
    f = x_ref[...].astype(jnp.bfloat16)

    def layer_step(layer, act):
        y = jnp.dot(act, w_ref[layer], preferred_element_type=jnp.float32)
        y = y + b_ref[layer]                      # (1, D) f32 bias broadcasts
        return y.astype(jnp.bfloat16)

    n_inner = n_layer - 1
    if n_inner <= 4:
        for layer in range(n_inner):              # shallow stack: static unroll
            f = layer_step(layer, f)
    else:
        # Deep stack: visible loop keeps only one weight slice live and gives
        # the scheduler a loop instead of a huge unrolled region.
        f = lax.fori_loop(0, n_inner, layer_step, f)

    # Last layer: store straight from the f32 MXU accumulator (no extra
    # bf16 round-trip on the output).
    last = n_layer - 1
    y = jnp.dot(f, w_ref[last], preferred_element_type=jnp.float32) + b_ref[last]
    o_ref[...] = y.astype(o_ref.dtype)


def prepare_params(weights, biases):
    """weights: list of (n_model, n_model) PyTorch-layout (out, in) f32 arrays.
    biases: list of (n_model,) f32 arrays.
    Returns w_stack (L, D, D) bf16 pre-transposed to (in, out), b_stack (L, 1, D) f32."""
    ws = [jnp.asarray(w, jnp.float32).T.astype(jnp.bfloat16) for w in weights]
    bs = [jnp.asarray(b, jnp.float32).reshape(1, -1) for b in biases]
    return jnp.stack(ws), jnp.stack(bs)


# Conservative resident-VMEM budget: stays under v7x's 32 MiB scoped default
# (and well under v5e/v6e), leaving headroom for compiler scratch.
_VMEM_BUDGET = 24 * 1024 * 1024


def _choose_row_tile(batch, d, n_layer):
    # Weights/bias are VMEM-resident and single-buffered across the whole grid;
    # the x/out tiles (double-buffered, f32) take what is left of the budget.
    w_bytes = n_layer * d * d * 2 + n_layer * d * 4
    avail = max(_VMEM_BUDGET - w_bytes, 2 * 1024 * 1024)
    per_row = 4 * d * 4                       # 2 x-buffers + 2 out-buffers, f32
    cap = max(8, (avail // per_row) // 8 * 8)
    tb = min(512, cap)                        # ~512 rows ~= HBM-roofline sweet spot
    if tb >= 256:
        tb = (tb // 256) * 256                # fill 256-row MXU granules (v6e/v7x)
    if batch <= tb:
        if batch >= 16:
            # Don't collapse to a single tile: keep >= 2 row tiles so the
            # "parallel" grid axis can be sharded across v7x's two TensorCores.
            tb = _round_up((batch + 1) // 2, 8)
        else:
            tb = _round_up(max(batch, 1), 8)  # tiny batch: one tile, minimal pad
    return tb


def transformer_forward(x, w_stack, b_stack, *, row_tile=None):
    """x: (..., n_model) f32.  Returns (..., n_model) f32."""
    lead = x.shape[:-1]
    d = x.shape[-1]
    L = w_stack.shape[0]

    x2 = x.reshape(-1, d).astype(jnp.float32)
    B = x2.shape[0]

    if row_tile is None:
        tb = _choose_row_tile(B, d, L)
    else:
        tb = max(8, _round_up(row_tile, 8))
    b_pad = _round_up(B, tb)
    grid = (b_pad // tb,)

    # Pad batch rows only.  The feature axis stays at n_model: at small n_model
    # a wrapper-side lane pad + output slice would add two extra HBM passes and
    # multiply x/out bytes, which dominates an already memory/overhead-bound op.
    if b_pad != B:
        x2 = jnp.pad(x2, ((0, b_pad - B), (0, 0)))

    est_vmem = (L * d * d * 2 + L * d * 4) + 4 * tb * d * 4
    cp_kwargs = dict(dimension_semantics=("parallel",))
    if est_vmem > 12 * 1024 * 1024:
        # Past v5e's 16 MiB scoped default: request what we need plus headroom.
        cp_kwargs["vmem_limit_bytes"] = min(
            int(est_vmem * 3 // 2) + (4 << 20), 100 * 1024 * 1024
        )

    cost = pl.CostEstimate(
        flops=2 * b_pad * d * d * L,
        transcendentals=0,
        bytes_accessed=2 * b_pad * d * 4 + L * d * d * 2 + L * d * 4,
    )

    kernel = functools.partial(_linear_stack_kernel, n_layer=L)

    out = pl.pallas_call(
        kernel,
        out_shape=jax.ShapeDtypeStruct((b_pad, d), jnp.float32),
        grid=grid,
        in_specs=[
            pl.BlockSpec((tb, d), lambda i: (i, 0)),          # x: tiled on rows
            # Grid-invariant blocks: a second pipeline buffer would only double
            # the resident weight footprint, so request a single buffer.
            pl.BlockSpec((L, d, d), lambda i: (0, 0, 0),
                         pipeline_mode=pl.Buffered(1)),       # weights resident
            pl.BlockSpec((L, 1, d), lambda i: (0, 0, 0),
                         pipeline_mode=pl.Buffered(1)),       # biases resident
        ],
        out_specs=pl.BlockSpec((tb, d), lambda i: (i, 0)),
        compiler_params=pltpu.CompilerParams(**cp_kwargs),
        cost_estimate=cost,
    )(x2, w_stack, b_stack)

    if b_pad != B:
        out = out[:B]
    return out.reshape(*lead, d)


if __name__ == "__main__":
    key = jax.random.PRNGKey(0)

    # Small shapes consistent with the module: n_head is accepted by the module
    # but unused in its forward (no attention), so it only matters for init.
    n_model, n_head, n_layer = 32, 4, 2
    B = 24

    keys = jax.random.split(key, 2 * n_layer + 1)
    kx = keys[0]
    bound = 1.0 / jnp.sqrt(jnp.float32(n_model))
    weights, biases = [], []
    for l in range(n_layer):
        kw, kb = keys[1 + 2 * l], keys[2 + 2 * l]
        weights.append(
            jax.random.uniform(kw, (n_model, n_model), jnp.float32, -bound, bound)
        )
        biases.append(
            jax.random.uniform(kb, (n_model,), jnp.float32, -bound, bound)
        )

    x = jax.random.normal(kx, (B, n_model), jnp.float32)

    w_stack, b_stack = prepare_params(weights, biases)

    # Default tiling: B=24 -> row tile 16 -> 2 grid steps (exercises the tiled,
    # pipelined path and the >=2-tiles megacore rule).
    out = transformer_forward(x, w_stack, b_stack)
    jax.block_until_ready(out)

    # Pure-JAX f32 reference mirroring the PyTorch module exactly.
    ref = x
    for w, b in zip(weights, biases):
        ref = ref @ w.T + b

    assert out.shape == (B, n_model)
    # bf16 weights / bf16 activation carry (f32 MXU accumulation) vs f32 ref.
    max_err = float(jnp.max(jnp.abs(out - ref)))
    assert jnp.allclose(out, ref, atol=5e-2, rtol=5e-2), max_err

    print("KERNEL_OK")
</pallas_src>

<mosaic_0001>
module attributes {stable_mosaic.version = 11 : i64} {
  func.func @_linear_stack_kernel(%arg0: i32, %arg1: memref<16x32xf32, #tpu.memory_space<vmem>>, %arg2: memref<2x32x32xbf16, #tpu.memory_space<vmem>>, %arg3: memref<2x1x32xf32, #tpu.memory_space<vmem>>, %arg4: memref<16x32xf32, #tpu.memory_space<vmem>>) attributes {dimension_semantics = [#tpu.dimension_semantics<parallel>], iteration_bounds = array<i64: 2>, scalar_prefetch = 0 : i64, scratch_operands = 0 : i64, tpu.core_type = #tpu.core_type<tc>, window_params = [{transform_indices = @transform_0, window_bounds = array<i64: 16, 32>}, {pipeline_mode = #tpu.pipeline_mode<synchronous>, transform_indices = @transform_1, window_bounds = array<i64: 2, 32, 32>}, {pipeline_mode = #tpu.pipeline_mode<synchronous>, transform_indices = @transform_2, window_bounds = array<i64: 2, 1, 32>}, {transform_indices = @transform_3, window_bounds = array<i64: 16, 32>}]} {
    %c0 = arith.constant 0 : index
    %c0_0 = arith.constant 0 : index
    %0 = vector.load %arg1[%c0, %c0_0] : memref<16x32xf32, #tpu.memory_space<vmem>>, vector<16x32xf32>
    %1 = arith.truncf %0 : vector<16x32xf32> to vector<16x32xbf16>
    %c0_1 = arith.constant 0 : index
    %c0_2 = arith.constant 0 : index
    %c0_3 = arith.constant 0 : index
    %2 = vector.load %arg2[%c0_1, %c0_2, %c0_3] : memref<2x32x32xbf16, #tpu.memory_space<vmem>>, vector<1x32x32xbf16>
    %3 = vector.shape_cast %2 : vector<1x32x32xbf16> to vector<32x32xbf16>
    %cst = arith.constant dense<0.000000e+00> : vector<16x32xf32>
    %4 = tpu.matmul %1, %3, %cst {dimension_numbers = #tpu.dot_dimension_numbers<[1], [0], [0], [1], [0, 0, 1, 1], [], []>} : vector<16x32xbf16>, vector<32x32xbf16>, vector<16x32xf32> -> vector<16x32xf32>
    %c0_4 = arith.constant 0 : index
    %c0_5 = arith.constant 0 : index
    %c0_6 = arith.constant 0 : index
    %5 = vector.load %arg3[%c0_4, %c0_5, %c0_6] : memref<2x1x32xf32, #tpu.memory_space<vmem>>, vector<1x1x32xf32>
    %6 = vector.shape_cast %5 : vector<1x1x32xf32> to vector<1x32xf32>
    %7 = vector.broadcast %6 : vector<1x32xf32> to vector<16x32xf32>
    %8 = arith.addf %4, %7 : vector<16x32xf32>
    %9 = arith.truncf %8 : vector<16x32xf32> to vector<16x32xbf16>
    %c1 = arith.constant 1 : index
    %c0_7 = arith.constant 0 : index
    %c0_8 = arith.constant 0 : index
    %10 = vector.load %arg2[%c1, %c0_7, %c0_8] : memref<2x32x32xbf16, #tpu.memory_space<vmem>>, vector<1x32x32xbf16>
    %11 = vector.shape_cast %10 : vector<1x32x32xbf16> to vector<32x32xbf16>
    %cst_9 = arith.constant dense<0.000000e+00> : vector<16x32xf32>
    %12 = tpu.matmul %9, %11, %cst_9 {dimension_numbers = #tpu.dot_dimension_numbers<[1], [0], [0], [1], [0, 0, 1, 1], [], []>} : vector<16x32xbf16>, vector<32x32xbf16>, vector<16x32xf32> -> vector<16x32xf32>
    %c1_10 = arith.constant 1 : index
    %c0_11 = arith.constant 0 : index
    %c0_12 = arith.constant 0 : index
    %13 = vector.load %arg3[%c1_10, %c0_11, %c0_12] : memref<2x1x32xf32, #tpu.memory_space<vmem>>, vector<1x1x32xf32>
    %14 = vector.shape_cast %13 : vector<1x1x32xf32> to vector<1x32xf32>
    %15 = vector.broadcast %14 : vector<1x32xf32> to vector<16x32xf32>
    %16 = arith.addf %12, %15 : vector<16x32xf32>
    %c0_13 = arith.constant 0 : index
    %c0_14 = arith.constant 0 : index
    %17 = vector.load %arg4[%c0_13, %c0_14] : memref<16x32xf32, #tpu.memory_space<vmem>>, vector<16x32xf32>
    tpu.vector_store %arg4[%c0_13, %c0_14], %16 {strides = array<i32>} : memref<16x32xf32, #tpu.memory_space<vmem>>, vector<16x32xf32>,
    return
  }
  func.func @transform_0(%arg0: i32) -> (i32, i32) {
    %c0_i32 = arith.constant 0 : i32
    %c0_i32_0 = arith.constant 0 : i32
    return %arg0, %c0_i32 : i32, i32
  }
  func.func @transform_1(%arg0: i32) -> (i32, i32, i32) {
    %c0_i32 = arith.constant 0 : i32
    %c0_i32_0 = arith.constant 0 : i32
    %c0_i32_1 = arith.constant 0 : i32
    %c0_i32_2 = arith.constant 0 : i32
    return %c0_i32, %c0_i32_0, %c0_i32_1 : i32, i32, i32
  }
  func.func @transform_2(%arg0: i32) -> (i32, i32, i32) {
    %c0_i32 = arith.constant 0 : i32
    %c0_i32_0 = arith.constant 0 : i32
    %c0_i32_1 = arith.constant 0 : i32
    %c0_i32_2 = arith.constant 0 : i32
    return %c0_i32, %c0_i32_0, %c0_i32_1 : i32, i32, i32
  }
  func.func @transform_3(%arg0: i32) -> (i32, i32) {
    %c0_i32 = arith.constant 0 : i32
    %c0_i32_0 = arith.constant 0 : i32
    return %arg0, %c0_i32 : i32, i32
  }
}

</mosaic_0001>

<llo_original>
// kernel: tpu_custom_call.1
$region0: #{tpu_custom_call.1}
  #allocation0 [shape = 'u32[]', space=smem, size = 0x4, offset = 0x4, fixed_abs, tag = 'smem constant byte address 0x4 - core index']
  #allocation1 [shape = 'u32[72,128]{1,0:T(1,128)}', space=vmem, size = 0x9000, scoped, tag = 'internal scratch']
  %s0 = inlined_call_operand.hbm [shape: f32[32,32], index: 0, kind: input, shape index: {}]
  %s1 = inlined_call_operand.hbm [shape: bf16[2,32,32], index: 1, kind: input, shape index: {}]
  %s2 = inlined_call_operand.hbm [shape: f32[2,1,32], index: 2, kind: input, shape index: {}]
  %s3 = inlined_call_operand.hbm [shape: f32[32,32], index: 3, kind: output, shape index: {}]
  %s4 = sld [smem:[#allocation0]]
  $region57: #{tpu_custom_call.1} parent=0
    _
  %s6 = ssub.s32 1, %s4
  %s7 = scalar_select 0, %s6, %s4
  $region1: #{tpu_custom_call.1} parent=0
    #allocation2 [shape = 'u8[16384]{0}', space=vmem, size = 0x4000, scoped, tag = 'input window, operand 0']
    #allocation3 [shape = 's32[2]{0}', space=sflag, size = 0x8, scoped, tag = 'scoped memory for tpu_custom_call.1']
    #allocation4 [shape = 's32[2]{0}', space=sflag, size = 0x8, scoped, tag = 'scoped memory for tpu_custom_call.1']
    #allocation5 [shape = 'u8[16384]{0}', space=vmem, size = 0x4000, scoped, tag = 'input window, operand 1, single buffered']
    #allocation6 [shape = 's32[1]{0}', space=sflag, size = 0x4, scoped, tag = 'scoped memory for tpu_custom_call.1']
    #allocation7 [shape = 'u8[1024]{0}', space=vmem, size = 0x400, scoped, tag = 'input window, operand 2, single buffered']
    #allocation8 [shape = 'u8[16384]{0}', space=vmem, size = 0x4000, scoped, tag = 'output window, operand 0']
    %8 = vsyncpa [#allocation3], 0
    %s9 = scalar_lea.sflag [#allocation3], 1
    %10 = vsyncpa %s9, 0
    %11 = vsyncpa [#allocation6], 0
    %12 = vsyncpa [#allocation4], 0
    %s13 = scalar_lea.sflag [#allocation4], 1
    %14 = vsyncpa %s13, 0
    loop: start=0, step=1, limit=4
    $region2: #{tpu_custom_call.1} parent=1 // loop_pre_header
      _
    $region3: #{tpu_custom_call.1} parent=1 // loop_header
      %s16 = sphi 0, %s20
      %p17 = scmp.ge.s32.totalorder %s16, 4
      %s26 = sphi 0, %s28
      %s29 = sphi 0, %s26
      %s30 = sphi 0, %s29
      %s46 = sphi 0, %s30
      %s50 = sphi 0, %s50
      %s52 = sphi 0, %s50
      %s53 = sphi 0, %s52
      %s67 = sphi 0, %s53
      %s71 = sphi 0, %s71
      %s73 = sphi 0, %s71
      %s74 = sphi 0, %s73
      %s88 = sphi 0, %s74
      %s94 = sphi 0, %s96
      %s97 = sphi 0, %s94
      %s98 = sphi 0, %s97
      %s114 = sphi 0, %s98
    $region4: #{tpu_custom_call.1} parent=1 // loop_header_branch
      %19 = sbr.rel (%p17) target = $region8
    $region5: #{tpu_custom_call.1} parent=1 // loop_body
      %s21 = ssub.s32 %s16, 1
      %s22 = ssub.s32 %s16, 2
      %s23 = sadd.s32 %s16, 1
      %s24 = ssub.s32 %s16, %s23
      %p25 = scmp.eq.s32.totalorder %s24, 0
      %s27 = sadd.s32 %s26, 1
      %s28 = scalar_select %p25, %s26, %s27
      %p31 = pneg %p25
      %p32 = scmp.eq.s32.totalorder %s16, 1
      %p33 = por %p31, %p32
      %p34 = scmp.ne.s32.totalorder %s26, %s29
      %p35 = scmp.eq.s32.totalorder %s16, 0
      %p36 = por %p34, %p35
      %p37 = scmp.ne.s32.totalorder %s26, %s29
      %p38 = scmp.eq.s32.totalorder %s21, 1
      %p39 = por %p37, %p38
      %p40 = scmp.ne.s32.totalorder %s29, %s30
      %p41 = scmp.eq.s32.totalorder %s21, 0
      %p42 = por %p40, %p41
      %p43 = scmp.ne.s32.totalorder %s29, %s30
      %p44 = scmp.eq.s32.totalorder %s22, 1
      %p45 = por %p43, %p44
      %p47 = scmp.ne.s32.totalorder %s30, %s46
      %p48 = scmp.eq.s32.totalorder %s22, 0
      %p49 = por %p47, %p48
      %s51 = sadd.s32 %s50, 1
      %p54 = scmp.eq.s32.totalorder %s16, 1
      %p55 = scmp.ne.s32.totalorder %s50, %s52
      %p56 = scmp.eq.s32.totalorder %s16, 0
      %p57 = por %p55, %p56
      %p58 = scmp.ne.s32.totalorder %s50, %s52
      %p59 = scmp.eq.s32.totalorder %s21, 1
      %p60 = por %p58, %p59
      %p61 = scmp.ne.s32.totalorder %s52, %s53
      %p62 = scmp.eq.s32.totalorder %s21, 0
      %p63 = por %p61, %p62
      %p64 = scmp.ne.s32.totalorder %s52, %s53
      %p65 = scmp.eq.s32.totalorder %s22, 1
      %p66 = por %p64, %p65
      %p68 = scmp.ne.s32.totalorder %s53, %s67
      %p69 = scmp.eq.s32.totalorder %s22, 0
      %p70 = por %p68, %p69
      %s72 = sadd.s32 %s71, 1
      %p75 = scmp.eq.s32.totalorder %s16, 1
      %p76 = scmp.ne.s32.totalorder %s71, %s73
      %p77 = scmp.eq.s32.totalorder %s16, 0
      %p78 = por %p76, %p77
      %p79 = scmp.ne.s32.totalorder %s71, %s73
      %p80 = scmp.eq.s32.totalorder %s21, 1
      %p81 = por %p79, %p80
      %p82 = scmp.ne.s32.totalorder %s73, %s74
      %p83 = scmp.eq.s32.totalorder %s21, 0
      %p84 = por %p82, %p83
      %p85 = scmp.ne.s32.totalorder %s73, %s74
      %p86 = scmp.eq.s32.totalorder %s22, 1
      %p87 = por %p85, %p86
      %p89 = scmp.ne.s32.totalorder %s74, %s88
      %p90 = scmp.eq.s32.totalorder %s22, 0
      %p91 = por %p89, %p90
      %s92 = ssub.s32 %s16, %s23
      %p93 = scmp.eq.s32.totalorder %s92, 0
      %s95 = sadd.s32 %s94, 1
      %s96 = scalar_select %p93, %s94, %s95
      %p99 = pneg %p93
      %p100 = scmp.eq.s32.totalorder %s16, 1
      %p101 = por %p99, %p100
      %p102 = scmp.ne.s32.totalorder %s94, %s97
      %p103 = scmp.eq.s32.totalorder %s16, 0
      %p104 = por %p102, %p103
      %p105 = scmp.ne.s32.totalorder %s94, %s97
      %p106 = scmp.eq.s32.totalorder %s21, 1
      %p107 = por %p105, %p106
      %p108 = scmp.ne.s32.totalorder %s97, %s98
      %p109 = scmp.eq.s32.totalorder %s21, 0
      %p110 = por %p108, %p109
      %p111 = scmp.ne.s32.totalorder %s97, %s98
      %p112 = scmp.eq.s32.totalorder %s22, 1
      %p113 = por %p111, %p112
      %p115 = scmp.ne.s32.totalorder %s98, %s114
      %p116 = scmp.eq.s32.totalorder %s22, 0
      %p117 = por %p115, %p116
      %p118 = scmp.le.s32.totalorder 1, %s16
      %p119 = scmp.lt.s32.totalorder %s16, 3
      %p120 = pnand %p118, %p119
      %p121 = pneg %p120
      // Predicated region
      $region9: #{tpu_custom_call.1} parent=5 // pred_check
        _
      $region10: #{tpu_custom_call.1} parent=5 // pred_check_branch
        %123 = sbr.rel (%p120) target = $region12
      $region11: #{tpu_custom_call.1} parent=5 // pred_region
        %s124 = ssub.s32 %s16, 1
        // Predicated region
        $region13: #{tpu_custom_call.1} parent=11 // pred_check
          %p125 = pneg %p63
        $region14: #{tpu_custom_call.1} parent=11 // pred_check_branch
          %127 = sbr.rel (%p125) target = $region16
        $region15: #{tpu_custom_call.1} parent=11 // pred_region
          %129 = vsyncadd [#allocation6], 0
          %s130 = sshll.u32 %s1, 4
          %s131 = int_to_ptr.hbm [resolvable:$true] %s130
          %s132 = sshll.u32 [#allocation5], 4
          %s133 = int_to_ptr.vmem [resolvable:$true] %s132
          %138 = dma.hbm_to_vmem [thread:$0]  %s131, 512, %s133, [#allocation6], 64, 64, 4
        $region16: #{tpu_custom_call.1} parent=11 // pred_fallthru
          _
        // Predicated region
        $region17: #{tpu_custom_call.1} parent=11 // pred_check
          %p139 = pneg %p84
        $region18: #{tpu_custom_call.1} parent=11 // pred_check_branch
          %141 = sbr.rel (%p139) target = $region20
        $region19: #{tpu_custom_call.1} parent=11 // pred_region
          %143 = vsyncadd [#allocation6], 0
          %s144 = sshll.u32 %s2, 4
          %s145 = int_to_ptr.hbm [resolvable:$true] %s144
          %s146 = sshll.u32 [#allocation7], 4
          %s147 = int_to_ptr.vmem [resolvable:$true] %s146
          %152 = dma.hbm_to_vmem [thread:$0]  %s145, 32, %s147, [#allocation6], 16, 16, 1
        $region20: #{tpu_custom_call.1} parent=11 // pred_fallthru
          _
      $region12: #{tpu_custom_call.1} parent=5 // pred_fallthru
        _
      %p153 = scmp.lt.s32.totalorder %s16, 2
      // Predicated region
      $region21: #{tpu_custom_call.1} parent=5 // pred_check
        %p154 = pneg %p153
      $region22: #{tpu_custom_call.1} parent=5 // pred_check_branch
        %156 = sbr.rel (%p154) target = $region24
      $region23: #{tpu_custom_call.1} parent=5 // pred_region
        // Predicated region
        $region25: #{tpu_custom_call.1} parent=23 // pred_check
          %p157 = pneg %p36
        $region26: #{tpu_custom_call.1} parent=23 // pred_check_branch
          %159 = sbr.rel (%p157) target = $region28
        $region27: #{tpu_custom_call.1} parent=23 // pred_region
          %s160 = sand.u32 %s26, 1
          %s161 = scalar_lea.sflag [#allocation3], %s160
          %s162 = sand.u32 %s26, 1
          %s163 = smul.addr %s162, 16
          %s164 = scalar_lea.vmem [#allocation2], %s163
          %s165 = smul.u32 2, %s16
          %167 = vsyncadd %s161, 0
          %s168 = smul.addr %s165, 8
          %s169 = scalar_lea.hbm %s0, %s168
          %s170 = sshll.u32 %s169, 4
          %s171 = int_to_ptr.hbm [resolvable:$true] %s170
          %s172 = sshll.u32 %s164, 4
          %s173 = int_to_ptr.vmem [resolvable:$true] %s172
          %178 = dma.hbm_to_vmem [thread:$0]  %s171, 256, %s173, %s161, 128, 128, 8
        $region28: #{tpu_custom_call.1} parent=23 // pred_fallthru
          _
      $region24: #{tpu_custom_call.1} parent=5 // pred_fallthru
        _
      %p179 = scmp.le.s32.totalorder 1, %s16
      %p180 = scmp.lt.s32.totalorder %s16, 3
      %p181 = pnand %p179, %p180
      %p182 = pneg %p181
      // Predicated region
      $region29: #{tpu_custom_call.1} parent=5 // pred_check
        _
      $region30: #{tpu_custom_call.1} parent=5 // pred_check_branch
        %184 = sbr.rel (%p181) target = $region32
      $region31: #{tpu_custom_call.1} parent=5 // pred_region
        %s185 = ssub.s32 %s16, 1
        %s186 = sand.u32 %s29, 1
        %s187 = scalar_lea.sflag [#allocation3], %s186
        %s188 = sand.u32 %s29, 1
        %s189 = smul.addr %s188, 16
        %s190 = scalar_lea.vmem [#allocation2], %s189
        // Predicated region
        $region33: #{tpu_custom_call.1} parent=31 // pred_check
          %p191 = pneg %p42
        $region34: #{tpu_custom_call.1} parent=31 // pred_check_branch
          %193 = sbr.rel (%p191) target = $region36
        $region35: #{tpu_custom_call.1} parent=31 // pred_region
          %195 = dma.done %s187, 256
        $region36: #{tpu_custom_call.1} parent=31 // pred_fallthru
          _
        // Predicated region
        $region37: #{tpu_custom_call.1} parent=31 // pred_check
          %p196 = pneg %p63
        $region38: #{tpu_custom_call.1} parent=31 // pred_check_branch
          %198 = sbr.rel (%p196) target = $region40
        $region39: #{tpu_custom_call.1} parent=31 // pred_region
          %200 = dma.done [#allocation6], 512
        $region40: #{tpu_custom_call.1} parent=31 // pred_fallthru
          _
        // Predicated region
        $region41: #{tpu_custom_call.1} parent=31 // pred_check
          %p201 = pneg %p84
        $region42: #{tpu_custom_call.1} parent=31 // pred_check_branch
          %203 = sbr.rel (%p201) target = $region44
        $region43: #{tpu_custom_call.1} parent=31 // pred_region
          %205 = dma.done [#allocation6], 32
        $region44: #{tpu_custom_call.1} parent=31 // pred_fallthru
          _
        %s206 = sand.u32 %s29, 1
        %s207 = scalar_lea.sflag [#allocation3], %s206
        %s208 = sand.u32 %s29, 1
        %s209 = smul.addr %s208, 16
        %s210 = scalar_lea.vmem [#allocation2], %s209
        %p211 = pneg %p42
        %p212 = pneg %p39
        %p213 = pneg %p63
        %p214 = pneg %p60
        %p215 = pneg %p84
        %p216 = pneg %p81
        %p217 = pneg %p110
        %p218 = pneg %p107
        %s219 = sand.u32 %s97, 1
        %s220 = scalar_lea.sflag [#allocation4], %s219
        %s221 = sand.u32 %s97, 1
        %s222 = smul.addr %s221, 16
        %s223 = scalar_lea.vmem [#allocation8], %s222
        %s224 = smul.u32 2, %s21
        %s225 = smul.u32 2, %s21
        %v227 = vld [vmem:[%s190] sm:$0xff]
        %v228 = vld [vmem:[%s190 + $0x8] sm:$0xff]
        %v229 = vpack.c.bf16 %v228, %v227
        %v230 = vld [vmem:[#allocation5] sm:$0xf]
        %v231 = vld [vmem:[#allocation5 + $0x4] sm:$0xf]
        %v232 = vld [vmem:[#allocation5 + $0x8] sm:$0xf]
        %v233 = vld [vmem:[#allocation5 + $0xc] sm:$0xf]
        %v234 = vld [vmem:[#allocation7] sm:$0x1]
        %v236 = vperm.slane %v234, 0
        %v242 = vunpack.c.l.b16 %v230
        %v243 = vunpack.c.l.b16 %v231
        %v244 = vunpack.c.l.b16 %v232
        %v245 = vunpack.c.l.b16 %v233
        %v246 = vpack.c.b16 %v243, %v242
        %v247 = vpack.c.b16 %v245, %v244
        %vm250 = vcmask 261120
        %v252 = vsel %vm250, %v229, 0
        %254 = vmatpush.bf16.msra.mxu0 0
        %255 = vmatpush.bf16.msra.mxu0 0
        %256 = vmatpush.bf16.msra.mxu0 0
        %257 = vmatpush.bf16.msra.mxu0 0
        %258 = vmatpush.bf16.msra.mxu0 0
        %259 = vmatpush.bf16.msra.mxu0 0
        %260 = vmatpush.bf16.msra.mxu0 %v247
        %261 = vmatpush.bf16.msra.mxu0 %v246
        %262 = vmatmul.bf16.gmra.mxu0 %v252
        %v263 = vpop.f32.mrf.mxu0
        %v264 = vadd.f32 %v236, %v263
        %v265 = vpop.f32.mrf.mxu0
        %v266 = vadd.f32 %v236, %v265
        %267 = vdwg.mxu0
        %v268 = vpack.c.bf16 %v266, %v264
        %s269 = scalar_lea.vmem [#allocation5], 16
        %v270 = vld [vmem:[%s269] sm:$0xf]
        %v271 = vld [vmem:[%s269 + $0x4] sm:$0xf]
        %v272 = vld [vmem:[%s269 + $0x8] sm:$0xf]
        %v273 = vld [vmem:[%s269 + $0xc] sm:$0xf]
        %s274 = scalar_lea.vmem [#allocation7], 1
        %v275 = vld [vmem:[%s274] sm:$0x1]
        %v277 = vperm.slane %v275, 0
        %v283 = vunpack.c.l.b16 %v270
        %v284 = vunpack.c.l.b16 %v271
        %v285 = vunpack.c.l.b16 %v272
        %v286 = vunpack.c.l.b16 %v273
        %v287 = vpack.c.b16 %v284, %v283
        %v288 = vpack.c.b16 %v286, %v285
        %v292 = vsel %vm250, %v268, 0
        %294 = vmatpush.bf16.msra.mxu0 0
        %295 = vmatpush.bf16.msra.mxu0 0
        %296 = vmatpush.bf16.msra.mxu0 0
        %297 = vmatpush.bf16.msra.mxu0 0
        %298 = vmatpush.bf16.msra.mxu0 0
        %299 = vmatpush.bf16.msra.mxu0 0
        %300 = vmatpush.bf16.msra.mxu0 %v288
        %301 = vmatpush.bf16.msra.mxu0 %v287
        %302 = vmatmul.bf16.gmra.mxu0 %v292
        %v303 = vpop.f32.mrf.mxu0
        %v304 = vadd.f32 %v277, %v303
        %v305 = vpop.f32.mrf.mxu0
        %v306 = vadd.f32 %v277, %v305
        %307 = vdwg.mxu0
        %308 = vst.msk [vmem:[%s223] sm:$0xff] %vm250, %v304
        %309 = vst.msk [vmem:[%s223 + $0x8] sm:$0xff] %vm250, %v306
        %s310 = sand.u32 %s97, 1
        %s311 = scalar_lea.sflag [#allocation4], %s310
        %s312 = sand.u32 %s97, 1
        %s313 = smul.addr %s312, 16
        %s314 = scalar_lea.vmem [#allocation8], %s313
        // Predicated region
        $region45: #{tpu_custom_call.1} parent=31 // pred_check
          %p315 = pneg %p107
        $region46: #{tpu_custom_call.1} parent=31 // pred_check_branch
          %317 = sbr.rel (%p315) target = $region48
        $region47: #{tpu_custom_call.1} parent=31 // pred_region
          %s318 = smul.u32 2, %s21
          %320 = vsyncadd %s311, 0
          %s321 = smul.addr %s318, 8
          %s322 = scalar_lea.hbm %s3, %s321
          %s323 = sshll.u32 %s314, 4
          %s324 = int_to_ptr.vmem [resolvable:$true] %s323
          %s325 = sshll.u32 %s322, 4
          %s326 = int_to_ptr.hbm [resolvable:$true] %s325
          %331 = dma.vmem_to_hbm [thread:$0]  %s324, 256, %s326, %s311, 128, 128, 8
        $region48: #{tpu_custom_call.1} parent=31 // pred_fallthru
          _
      $region32: #{tpu_custom_call.1} parent=5 // pred_fallthru
        _
      %p332 = scmp.le.s32.totalorder 2, %s16
      // Predicated region
      $region49: #{tpu_custom_call.1} parent=5 // pred_check
        %p333 = pneg %p332
      $region50: #{tpu_custom_call.1} parent=5 // pred_check_branch
        %335 = sbr.rel (%p333) target = $region52
      $region51: #{tpu_custom_call.1} parent=5 // pred_region
        %s336 = ssub.s32 %s16, 2
        // Predicated region
        $region53: #{tpu_custom_call.1} parent=51 // pred_check
          %p337 = pneg %p113
        $region54: #{tpu_custom_call.1} parent=51 // pred_check_branch
          %339 = sbr.rel (%p337) target = $region56
        $region55: #{tpu_custom_call.1} parent=51 // pred_region
          %s340 = sand.u32 %s98, 1
          %s341 = scalar_lea.sflag [#allocation4], %s340
          %s342 = sand.u32 %s98, 1
          %s343 = smul.addr %s342, 16
          %s344 = scalar_lea.vmem [#allocation8], %s343
          %346 = dma.done %s341, 256
        $region56: #{tpu_custom_call.1} parent=51 // pred_fallthru
          _
      $region52: #{tpu_custom_call.1} parent=5 // pred_fallthru
        _
    $region6: #{tpu_custom_call.1} parent=1 // loop_footer
      %s20 = sadd.s32 1, %s16
    $region7: #{tpu_custom_call.1} parent=1 // loop_footer_branch
      %15 = sbr.rel target = $region3
    $region8: #{tpu_custom_call.1} parent=1 // loop_exit
      _
    %347 = vsyncpa [#allocation3], 1
    %s348 = scalar_lea.sflag [#allocation3], 1
    %349 = vsyncpa %s348, 1
    %350 = vsyncpa [#allocation6], 1
    %351 = vsyncpa [#allocation4], 1
    %s352 = scalar_lea.sflag [#allocation4], 1
    %353 = vsyncpa %s352, 1

</llo_original>
